<compile_context>
chip_gen: v7x
topology: tpu7x:2x2x1
jax: 0.10.0
libtpu: 0.0.40
codegen_flags: <defaults>
</compile_context>

<pallas_src>
import jax
import jax.numpy as jnp
from jax.experimental import pallas as pl
from jax.experimental.pallas import tpu as pltpu


_TILE_C_MAX = 1024                 # lane-dense column tile (multiple of 128)
_TILE_R_PREF = (1024, 512, 256)    # preferred row tiles (all multiples of 16)
_SMALL_INPUT_ELEMS = 512 * 1024    # below this, fused XLA beats a kernel launch


def _linreg_kernel(w_ref, b_ref, x_ref, o_ref):
    # w_ref, b_ref: SMEM refs of shape (1,), float32 (scalar parameters).
    # x_ref, o_ref: VMEM refs of shape (tile_r, tile_c) in the caller's dtype.
    w = w_ref[0]
    b = b_ref[0]
    # Widen per-vreg to f32 (no-op for f32 inputs, free VPU work for bf16),
    # multiply-add, and cast back to the storage dtype for the store.
    o_ref[...] = (w * x_ref[...].astype(jnp.float32) + b).astype(o_ref.dtype)


def _round_up(v, m):
    return pl.cdiv(v, m) * m


def _as_2d(x):
    """Collapse x to a lane-friendly 2-D view with a zero-copy reshape.

    Returns None when there is no layout the kernel handles well (the caller
    then falls back to fused XLA, which is at the HBM roofline anyway).
    """
    if x.ndim >= 2 and x.shape[-1] >= 128:
        # Natural collapse: fold leading dims into rows, keep last dim on lanes.
        return x.reshape(-1, x.shape[-1])
    # 1-D inputs / tiny trailing dims: find a lane-dense factorisation.
    n = x.size
    for c in (1024, 512, 256, 128):
        if n % c == 0:
            return x.reshape(-1, c)
    return None


def _pick_tiles(rows, cols):
    """Pick (tile_r, tile_c): big blocks, but >=8 grid steps when possible."""
    tile_c = min(_TILE_C_MAX, _round_up(cols, 128))
    col_steps = pl.cdiv(cols, tile_c)
    tile_r = _TILE_R_PREF[-1]
    for tr in _TILE_R_PREF:
        if pl.cdiv(rows, tr) * col_steps >= 8:
            tile_r = tr
            break
    return tile_r, tile_c


def _linreg_pallas_2d(x2d, weight, bias, tile_r, tile_c):
    rows, cols = x2d.shape
    grid = (pl.cdiv(rows, tile_r), pl.cdiv(cols, tile_c))
    return pl.pallas_call(
        _linreg_kernel,
        out_shape=jax.ShapeDtypeStruct((rows, cols), x2d.dtype),
        grid_spec=pltpu.PrefetchScalarGridSpec(
            num_scalar_prefetch=0,
            grid=grid,
            in_specs=[
                pl.BlockSpec(memory_space=pltpu.MemorySpace.SMEM),  # weight (1,)
                pl.BlockSpec(memory_space=pltpu.MemorySpace.SMEM),  # bias   (1,)
                pl.BlockSpec((tile_r, tile_c), lambda i, j: (i, j)),
            ],
            out_specs=pl.BlockSpec((tile_r, tile_c), lambda i, j: (i, j)),
        ),
        compiler_params=pltpu.CompilerParams(
            # Elementwise: every grid step independent -> shard over both TCs
            # on v7x (neutral on single-TC v5e/v6e).
            dimension_semantics=("parallel", "parallel"),
            # Max footprint: 2 x (in + out) x 4 MiB f32 blocks = 16 MiB, well
            # under this limit and under v7x's 64 MiB physical VMEM.
            vmem_limit_bytes=48 * 1024 * 1024,
        ),
    )(weight, bias, x2d)


def linear_regression_forward(x, weight, bias):
    """y = weight * x + bias (scalar weight/bias), any input shape/rank."""
    x = jnp.asarray(x)
    if not jnp.issubdtype(x.dtype, jnp.floating):
        x = x.astype(jnp.float32)
    weight = jnp.asarray(weight, dtype=jnp.float32).reshape((1,))
    bias = jnp.asarray(bias, dtype=jnp.float32).reshape((1,))

    # Output keeps the caller's floating dtype (bf16 stays bf16 -> half the HBM
    # traffic). Note: PyTorch type promotion would upcast bf16*f32 to f32.
    out_dtype = x.dtype

    n = x.size
    if n == 0 or n < _SMALL_INPUT_ELEMS:
        # Small-input fast path: fused XLA is at the roofline; kernel launch
        # overhead would dominate.
        return (weight[0] * x.astype(jnp.float32) + bias[0]).astype(out_dtype)

    x2d = _as_2d(x)
    if x2d is None:
        return (weight[0] * x.astype(jnp.float32) + bias[0]).astype(out_dtype)

    tile_r, tile_c = _pick_tiles(*x2d.shape)
    y2d = _linreg_pallas_2d(x2d, weight, bias, tile_r, tile_c)
    return y2d.reshape(x.shape)   # zero-copy reshape back (no padding was added)


if __name__ == "__main__":
    key = jax.random.PRNGKey(0)
    k_w, k_b, k_x = jax.random.split(key, 3)

    # Deterministic parameter init mirroring torch.randn(1) for weight & bias.
    weight = jax.random.normal(k_w, (1,), dtype=jnp.float32)
    bias = jax.random.normal(k_b, (1,), dtype=jnp.float32)

    # Non-block-multiple f32 input: exercises the natural 2-D collapse with
    # masked edge blocks (no pad/slice HBM copies) and a multi-step grid,
    # while staying small (~4 MiB) and fast.
    x = jax.random.normal(k_x, (1500, 700), dtype=jnp.float32)
    y = jax.block_until_ready(linear_regression_forward(x, weight, bias))
    y_ref = weight[0] * x + bias[0]
    assert y.shape == x.shape and y.dtype == jnp.float32
    assert jnp.allclose(y, y_ref, atol=1e-6, rtol=1e-6)

    # bf16 input: dtype preserved through the kernel (half the HBM traffic).
    x_bf16 = jax.random.normal(k_x, (2048, 1024), dtype=jnp.bfloat16)
    y_bf16 = jax.block_until_ready(linear_regression_forward(x_bf16, weight, bias))
    y_bf16_ref = (weight[0] * x_bf16.astype(jnp.float32)
                  + bias[0]).astype(jnp.bfloat16)
    assert y_bf16.dtype == jnp.bfloat16
    assert jnp.allclose(y_bf16.astype(jnp.float32),
                        y_bf16_ref.astype(jnp.float32), atol=1e-2, rtol=1e-2)

    # Small-input fast path (the classic (N, 1) linear-regression shape).
    x_small = jax.random.normal(k_x, (8, 1), dtype=jnp.float32)
    y_small = jax.block_until_ready(
        linear_regression_forward(x_small, weight, bias))
    assert jnp.allclose(y_small, weight[0] * x_small + bias[0],
                        atol=1e-6, rtol=1e-6)

    print("KERNEL_OK")
</pallas_src>

<mosaic_0001>
module attributes {stable_mosaic.version = 11 : i64} {
  func.func @_linreg_kernel(%arg0: i32, %arg1: i32, %arg2: memref<1xf32, #tpu.memory_space<smem>>, %arg3: memref<1xf32, #tpu.memory_space<smem>>, %arg4: memref<256x768xf32, #tpu.memory_space<vmem>>, %arg5: memref<256x768xf32, #tpu.memory_space<vmem>>) attributes {dimension_semantics = [#tpu.dimension_semantics<parallel>, #tpu.dimension_semantics<parallel>], iteration_bounds = array<i64: 6, 1>, scalar_prefetch = 0 : i64, scratch_operands = 0 : i64, tpu.core_type = #tpu.core_type<tc>, window_params = [{transform_indices = @transform_0, window_bounds = array<i64: 1>}, {transform_indices = @transform_1, window_bounds = array<i64: 1>}, {transform_indices = @transform_2, window_bounds = array<i64: 256, 768>}, {transform_indices = @transform_3, window_bounds = array<i64: 256, 768>}]} {
    %c0 = arith.constant 0 : index
    %0 = memref.load %arg2[%c0] : memref<1xf32, #tpu.memory_space<smem>>
    %c0_0 = arith.constant 0 : index
    %1 = memref.load %arg3[%c0_0] : memref<1xf32, #tpu.memory_space<smem>>
    %c0_1 = arith.constant 0 : index
    %c0_2 = arith.constant 0 : index
    %2 = vector.load %arg4[%c0_1, %c0_2] : memref<256x768xf32, #tpu.memory_space<vmem>>, vector<256x768xf32>
    %3 = vector.broadcast %0 : f32 to vector<256x768xf32>
    %4 = arith.mulf %3, %2 : vector<256x768xf32>
    %5 = vector.broadcast %1 : f32 to vector<256x768xf32>
    %6 = arith.addf %4, %5 : vector<256x768xf32>
    %c0_3 = arith.constant 0 : index
    %c0_4 = arith.constant 0 : index
    %7 = vector.load %arg5[%c0_3, %c0_4] : memref<256x768xf32, #tpu.memory_space<vmem>>, vector<256x768xf32>
    tpu.vector_store %arg5[%c0_3, %c0_4], %6 {strides = array<i32>} : memref<256x768xf32, #tpu.memory_space<vmem>>, vector<256x768xf32>,
    return
  }
  func.func @transform_0(%arg0: i32, %arg1: i32) -> i32 {
    %c0_i32 = arith.constant 0 : i32
    %c0_i32_0 = arith.constant 0 : i32
    return %c0_i32 : i32
  }
  func.func @transform_1(%arg0: i32, %arg1: i32) -> i32 {
    %c0_i32 = arith.constant 0 : i32
    %c0_i32_0 = arith.constant 0 : i32
    return %c0_i32 : i32
  }
  func.func @transform_2(%arg0: i32, %arg1: i32) -> (i32, i32) {
    %c0_i32 = arith.constant 0 : i32
    return %arg0, %arg1 : i32, i32
  }
  func.func @transform_3(%arg0: i32, %arg1: i32) -> (i32, i32) {
    %c0_i32 = arith.constant 0 : i32
    return %arg0, %arg1 : i32, i32
  }
}

</mosaic_0001>

<llo_original>
// kernel: tpu_custom_call.1
$region0: #{tpu_custom_call.1}
  #allocation0 [shape = 'u32[]', space=smem, size = 0x4, offset = 0x4, fixed_abs, tag = 'smem constant byte address 0x4 - core index']
  #allocation1 [shape = 'u32[144,128]{1,0:T(1,128)}', space=vmem, size = 0x12000, scoped, tag = 'internal scratch']
  #allocation2 [shape = 'f32[1]{0:T(128)S(6)}', space=smem, size = 0x200, scoped, tag = 'scoped memory for tpu_custom_call.1']
  #allocation3 [shape = 'f32[1]{0:T(128)S(6)}', space=smem, size = 0x200, scoped, tag = 'scoped memory for tpu_custom_call.1']
  %s0 = inlined_call_operand.<no memory space> [shape: f32[1], index: 0, kind: input, shape index: {}]
  %s1 = inlined_call_operand.<no memory space> [shape: f32[1], index: 1, kind: input, shape index: {}]
  %s2 = inlined_call_operand.vmem [shape: f32[1500,700], index: 2, kind: input, shape index: {}]
  %s3 = inlined_call_operand.vmem [shape: f32[1500,700], index: 3, kind: output, shape index: {}]
  %s4 = sld [smem:[#allocation0]]
  $region71: #{tpu_custom_call.1} parent=0
    _
  %s6 = ssub.s32 1, %s4
  %s7 = scalar_select 0, %s6, %s4
  %8 = sst [smem:[#allocation2]] %s0
  %9 = sst [smem:[#allocation3]] %s1
  $region1: #{tpu_custom_call.1} parent=0
    #allocation4 [shape = 'u8[1572864]{0}', space=vmem, size = 0x180000, scoped, tag = 'output window, operand 0']
    loop: start=0, step=1, limit=8
    $region2: #{tpu_custom_call.1} parent=1 // loop_pre_header
      _
    $region3: #{tpu_custom_call.1} parent=1 // loop_header
      %s11 = sphi 0, %s15
      %p12 = scmp.ge.s32.totalorder %s11, 8
      %s18 = sphi 0, %s30
      %s19 = sphi 0, %s26
      %s20 = sphi 0, %s18
      %s21 = sphi 0, %s19
      %s22 = sphi 0, %s20
      %s23 = sphi 0, %s21
      %s31 = sphi 0, %s31
      %s33 = sphi 0, %s31
      %s34 = sphi 0, %s33
      %s48 = sphi 0, %s34
      %s52 = sphi 0, %s52
      %s54 = sphi 0, %s52
      %s55 = sphi 0, %s54
      %s69 = sphi 0, %s55
      %s77 = sphi 0, %s79
      %s80 = sphi 0, %s77
      %s81 = sphi 0, %s80
      %s97 = sphi 0, %s81
      %s105 = sphi 0, %s107
      %s108 = sphi 0, %s105
      %s109 = sphi 0, %s108
      %s125 = sphi 0, %s109
    $region4: #{tpu_custom_call.1} parent=1 // loop_header_branch
      %14 = sbr.rel (%p12) target = $region8
    $region5: #{tpu_custom_call.1} parent=1 // loop_body
      %s16 = ssub.s32 %s11, 1
      %s17 = ssub.s32 %s11, 2
      %s24 = sadd.s32 1, %s19
      %p25 = scmp.ge.s32.totalorder %s24, 1
      %s26 = scalar_select %p25, 0, %s24
      %s27 = sadd.s32 1, %s18
      %s28 = scalar_select %p25, %s27, %s18
      %p29 = scmp.ge.s32.totalorder %s28, 6
      %s30 = scalar_select %p29, 0, %s28
      %s32 = sadd.s32 %s31, 1
      %p35 = scmp.eq.s32.totalorder %s11, 5
      %p36 = scmp.ne.s32.totalorder %s31, %s33
      %p37 = scmp.eq.s32.totalorder %s11, 0
      %p38 = por %p36, %p37
      %p39 = scmp.ne.s32.totalorder %s31, %s33
      %p40 = scmp.eq.s32.totalorder %s16, 5
      %p41 = por %p39, %p40
      %p42 = scmp.ne.s32.totalorder %s33, %s34
      %p43 = scmp.eq.s32.totalorder %s16, 0
      %p44 = por %p42, %p43
      %p45 = scmp.ne.s32.totalorder %s33, %s34
      %p46 = scmp.eq.s32.totalorder %s17, 5
      %p47 = por %p45, %p46
      %p49 = scmp.ne.s32.totalorder %s34, %s48
      %p50 = scmp.eq.s32.totalorder %s17, 0
      %p51 = por %p49, %p50
      %s53 = sadd.s32 %s52, 1
      %p56 = scmp.eq.s32.totalorder %s11, 5
      %p57 = scmp.ne.s32.totalorder %s52, %s54
      %p58 = scmp.eq.s32.totalorder %s11, 0
      %p59 = por %p57, %p58
      %p60 = scmp.ne.s32.totalorder %s52, %s54
      %p61 = scmp.eq.s32.totalorder %s16, 5
      %p62 = por %p60, %p61
      %p63 = scmp.ne.s32.totalorder %s54, %s55
      %p64 = scmp.eq.s32.totalorder %s16, 0
      %p65 = por %p63, %p64
      %p66 = scmp.ne.s32.totalorder %s54, %s55
      %p67 = scmp.eq.s32.totalorder %s17, 5
      %p68 = por %p66, %p67
      %p70 = scmp.ne.s32.totalorder %s55, %s69
      %p71 = scmp.eq.s32.totalorder %s17, 0
      %p72 = por %p70, %p71
      %s73 = ssub.s32 %s18, %s30
      %s74 = ssub.s32 %s19, %s26
      %s75 = sor.u32 %s73, %s74
      %p76 = scmp.eq.s32.totalorder %s75, 0
      %s78 = sadd.s32 %s77, 1
      %s79 = scalar_select %p76, %s77, %s78
      %p82 = pneg %p76
      %p83 = scmp.eq.s32.totalorder %s11, 5
      %p84 = por %p82, %p83
      %p85 = scmp.ne.s32.totalorder %s77, %s80
      %p86 = scmp.eq.s32.totalorder %s11, 0
      %p87 = por %p85, %p86
      %p88 = scmp.ne.s32.totalorder %s77, %s80
      %p89 = scmp.eq.s32.totalorder %s16, 5
      %p90 = por %p88, %p89
      %p91 = scmp.ne.s32.totalorder %s80, %s81
      %p92 = scmp.eq.s32.totalorder %s16, 0
      %p93 = por %p91, %p92
      %p94 = scmp.ne.s32.totalorder %s80, %s81
      %p95 = scmp.eq.s32.totalorder %s17, 5
      %p96 = por %p94, %p95
      %p98 = scmp.ne.s32.totalorder %s81, %s97
      %p99 = scmp.eq.s32.totalorder %s17, 0
      %p100 = por %p98, %p99
      %s101 = ssub.s32 %s18, %s30
      %s102 = ssub.s32 %s19, %s26
      %s103 = sor.u32 %s101, %s102
      %p104 = scmp.eq.s32.totalorder %s103, 0
      %s106 = sadd.s32 %s105, 1
      %s107 = scalar_select %p104, %s105, %s106
      %p110 = pneg %p104
      %p111 = scmp.eq.s32.totalorder %s11, 5
      %p112 = por %p110, %p111
      %p113 = scmp.ne.s32.totalorder %s105, %s108
      %p114 = scmp.eq.s32.totalorder %s11, 0
      %p115 = por %p113, %p114
      %p116 = scmp.ne.s32.totalorder %s105, %s108
      %p117 = scmp.eq.s32.totalorder %s16, 5
      %p118 = por %p116, %p117
      %p119 = scmp.ne.s32.totalorder %s108, %s109
      %p120 = scmp.eq.s32.totalorder %s16, 0
      %p121 = por %p119, %p120
      %p122 = scmp.ne.s32.totalorder %s108, %s109
      %p123 = scmp.eq.s32.totalorder %s17, 5
      %p124 = por %p122, %p123
      %p126 = scmp.ne.s32.totalorder %s109, %s125
      %p127 = scmp.eq.s32.totalorder %s17, 0
      %p128 = por %p126, %p127
      %p129 = scmp.le.s32.totalorder 1, %s11
      %p130 = scmp.lt.s32.totalorder %s11, 7
      %p131 = pnand %p129, %p130
      %p132 = pneg %p131
      // Predicated region
      $region9: #{tpu_custom_call.1} parent=5 // pred_check
        _
      $region10: #{tpu_custom_call.1} parent=5 // pred_check_branch
        %134 = sbr.rel (%p131) target = $region12
      $region11: #{tpu_custom_call.1} parent=5 // pred_region
        %s135 = ssub.s32 %s11, 1
        // Predicated region
        $region13: #{tpu_custom_call.1} parent=11 // pred_check
          %p136 = pneg %p44
        $region14: #{tpu_custom_call.1} parent=11 // pred_check_branch
          %138 = sbr.rel (%p136) target = $region16
        $region15: #{tpu_custom_call.1} parent=11 // pred_region
          _
        $region16: #{tpu_custom_call.1} parent=11 // pred_fallthru
          _
        // Predicated region
        $region17: #{tpu_custom_call.1} parent=11 // pred_check
          %p139 = pneg %p65
        $region18: #{tpu_custom_call.1} parent=11 // pred_check_branch
          %141 = sbr.rel (%p139) target = $region20
        $region19: #{tpu_custom_call.1} parent=11 // pred_region
          _
        $region20: #{tpu_custom_call.1} parent=11 // pred_fallthru
          _
      $region12: #{tpu_custom_call.1} parent=5 // pred_fallthru
        _
      %p142 = scmp.lt.s32.totalorder %s11, 6
      // Predicated region
      $region21: #{tpu_custom_call.1} parent=5 // pred_check
        %p143 = pneg %p142
      $region22: #{tpu_custom_call.1} parent=5 // pred_check_branch
        %145 = sbr.rel (%p143) target = $region24
      $region23: #{tpu_custom_call.1} parent=5 // pred_region
        // Predicated region
        $region25: #{tpu_custom_call.1} parent=23 // pred_check
          %p146 = pneg %p87
        $region26: #{tpu_custom_call.1} parent=23 // pred_check_branch
          %148 = sbr.rel (%p146) target = $region28
        $region27: #{tpu_custom_call.1} parent=23 // pred_region
          %s149 = smul.u32 32, %s18
          %s150 = smul.u32 6, %s19
          %s151 = ssub.s32 188, %s149
          %p152 = scmp.lt.s32.totalorder %s151, 32
          %s153 = scalar_select %p152, %s151, 32
          %s154 = smul.u32 128, %s153
          %s155 = smul.u32 %s154, 6
          %p156 = scmp.lt.s32.totalorder %s149, 187
          %s157 = scalar_select %p156, %s149, 187
          %p158 = scmp.lt.s32.totalorder %s150, 5
          %s159 = scalar_select %p158, %s150, 5
          %s160 = smul.addr %s157, 6
          %s161 = sadd.s32 %s159, %s160
          %s162 = smul.addr %s161, 8
          %s163 = scalar_lea.vmem %s2, %s162
          %s164 = smul.u32 32, %s18
          %s165 = smul.u32 6, %s19
          %s166 = ssub.s32 188, %s164
          %p167 = scmp.lt.s32.totalorder %s166, 32
          %s168 = scalar_select %p167, %s166, 32
          %s169 = smul.u32 128, %s168
          %s170 = smul.u32 %s169, 6
        $region28: #{tpu_custom_call.1} parent=23 // pred_fallthru
          _
      $region24: #{tpu_custom_call.1} parent=5 // pred_fallthru
        _
      %p171 = scmp.le.s32.totalorder 1, %s11
      %p172 = scmp.lt.s32.totalorder %s11, 7
      %p173 = pnand %p171, %p172
      %p174 = pneg %p173
      // Predicated region
      $region29: #{tpu_custom_call.1} parent=5 // pred_check
        _
      $region30: #{tpu_custom_call.1} parent=5 // pred_check_branch
        %176 = sbr.rel (%p173) target = $region32
      $region31: #{tpu_custom_call.1} parent=5 // pred_region
        %s177 = ssub.s32 %s11, 1
        %p178 = pneg %p44
        %p179 = pneg %p41
        %p180 = pneg %p65
        %p181 = pneg %p62
        %s182 = smul.u32 32, %s20
        %s183 = smul.u32 6, %s21
        %s184 = ssub.s32 188, %s182
        %p185 = scmp.lt.s32.totalorder %s184, 32
        %s186 = scalar_select %p185, %s184, 32
        %s187 = smul.u32 128, %s186
        %s188 = smul.u32 %s187, 6
        %p189 = scmp.lt.s32.totalorder %s182, 187
        %s190 = scalar_select %p189, %s182, 187
        %p191 = scmp.lt.s32.totalorder %s183, 5
        %s192 = scalar_select %p191, %s183, 5
        %s193 = smul.addr %s190, 6
        %s194 = sadd.s32 %s192, %s193
        %s195 = smul.addr %s194, 8
        %s196 = scalar_lea.vmem %s2, %s195
        %p197 = pneg %p93
        %p198 = pneg %p90
        %p199 = pneg %p121
        %p200 = pneg %p118
        %s201 = sand.u32 %s108, 1
        %s202 = sand.u32 %s108, 1
        %s203 = smul.addr %s202, 1536
        %s204 = scalar_lea.vmem [#allocation4], %s203
        %s205 = smul.u32 32, %s20
        %s206 = smul.u32 6, %s21
        %s207 = ssub.s32 188, %s205
        %p208 = scmp.lt.s32.totalorder %s207, 32
        %s209 = scalar_select %p208, %s207, 32
        %s210 = smul.u32 128, %s209
        %s211 = smul.u32 %s210, 6
        %p212 = scmp.lt.s32.totalorder %s205, 187
        %s213 = scalar_select %p212, %s205, 187
        %p214 = scmp.lt.s32.totalorder %s206, 5
        %s215 = scalar_select %p214, %s206, 5
        %s216 = smul.addr %s213, 6
        %s217 = sadd.s32 %s215, %s216
        %s218 = smul.addr %s217, 8
        %s219 = scalar_lea.vmem %s2, %s218
        %s220 = smul.u32 32, %s20
        %s221 = smul.u32 6, %s21
        %s222 = ssub.s32 188, %s220
        %p223 = scmp.lt.s32.totalorder %s222, 32
        %s224 = scalar_select %p223, %s222, 32
        %s225 = smul.u32 128, %s224
        %s226 = smul.u32 %s225, 6
        %s227 = smul.u32 32, %s20
        %s228 = smul.u32 6, %s21
        %s229 = ssub.s32 188, %s227
        %p230 = scmp.lt.s32.totalorder %s229, 32
        %s231 = scalar_select %p230, %s229, 32
        %s232 = smul.u32 128, %s231
        %s233 = smul.u32 %s232, 6
        %s234 = sld [smem:[#allocation2]]
        %s235 = sld [smem:[#allocation3]]
        %v236 = vld [vmem:[%s219] sm:$0xff]
        %v237 = vld [vmem:[%s219 + $0x8] sm:$0xff]
        %v238 = vld [vmem:[%s219 + $0x10] sm:$0xff]
        %v239 = vld [vmem:[%s219 + $0x18] sm:$0xff]
        %v240 = vld [vmem:[%s219 + $0x20] sm:$0xff]
        %v241 = vld [vmem:[%s219 + $0x28] sm:$0xff]
        %v242 = vld [vmem:[%s219 + $0x30] sm:$0xff]
        %v243 = vld [vmem:[%s219 + $0x38] sm:$0xff]
        %v244 = vld [vmem:[%s219 + $0x40] sm:$0xff]
        %v245 = vld [vmem:[%s219 + $0x48] sm:$0xff]
        %v246 = vld [vmem:[%s219 + $0x50] sm:$0xff]
        %v247 = vld [vmem:[%s219 + $0x58] sm:$0xff]
        %v248 = vld [vmem:[%s219 + $0x60] sm:$0xff]
        %v249 = vld [vmem:[%s219 + $0x68] sm:$0xff]
        %v250 = vld [vmem:[%s219 + $0x70] sm:$0xff]
        %v251 = vld [vmem:[%s219 + $0x78] sm:$0xff]
        %v252 = vld [vmem:[%s219 + $0x80] sm:$0xff]
        %v253 = vld [vmem:[%s219 + $0x88] sm:$0xff]
        %v254 = vld [vmem:[%s219 + $0x90] sm:$0xff]
        %v255 = vld [vmem:[%s219 + $0x98] sm:$0xff]
        %v256 = vld [vmem:[%s219 + $0xa0] sm:$0xff]
        %v257 = vld [vmem:[%s219 + $0xa8] sm:$0xff]
        %v258 = vld [vmem:[%s219 + $0xb0] sm:$0xff]
        %v259 = vld [vmem:[%s219 + $0xb8] sm:$0xff]
        %v260 = vld [vmem:[%s219 + $0xc0] sm:$0xff]
        %v261 = vld [vmem:[%s219 + $0xc8] sm:$0xff]
        %v262 = vld [vmem:[%s219 + $0xd0] sm:$0xff]
        %v263 = vld [vmem:[%s219 + $0xd8] sm:$0xff]
        %v264 = vld [vmem:[%s219 + $0xe0] sm:$0xff]
        %v265 = vld [vmem:[%s219 + $0xe8] sm:$0xff]
        %v266 = vld [vmem:[%s219 + $0xf0] sm:$0xff]
        %v267 = vld [vmem:[%s219 + $0xf8] sm:$0xff]
        %v268 = vld [vmem:[%s219 + $0x100] sm:$0xff]
        %v269 = vld [vmem:[%s219 + $0x108] sm:$0xff]
        %v270 = vld [vmem:[%s219 + $0x110] sm:$0xff]
        %v271 = vld [vmem:[%s219 + $0x118] sm:$0xff]
        %v272 = vld [vmem:[%s219 + $0x120] sm:$0xff]
        %v273 = vld [vmem:[%s219 + $0x128] sm:$0xff]
        %v274 = vld [vmem:[%s219 + $0x130] sm:$0xff]
        %v275 = vld [vmem:[%s219 + $0x138] sm:$0xff]
        %v276 = vld [vmem:[%s219 + $0x140] sm:$0xff]
        %v277 = vld [vmem:[%s219 + $0x148] sm:$0xff]
        %v278 = vld [vmem:[%s219 + $0x150] sm:$0xff]
        %v279 = vld [vmem:[%s219 + $0x158] sm:$0xff]
        %v280 = vld [vmem:[%s219 + $0x160] sm:$0xff]
        %v281 = vld [vmem:[%s219 + $0x168] sm:$0xff]
        %v282 = vld [vmem:[%s219 + $0x170] sm:$0xff]
        %v283 = vld [vmem:[%s219 + $0x178] sm:$0xff]
        %v284 = vld [vmem:[%s219 + $0x180] sm:$0xff]
        %v285 = vld [vmem:[%s219 + $0x188] sm:$0xff]
        %v286 = vld [vmem:[%s219 + $0x190] sm:$0xff]
        %v287 = vld [vmem:[%s219 + $0x198] sm:$0xff]
        %v288 = vld [vmem:[%s219 + $0x1a0] sm:$0xff]
        %v289 = vld [vmem:[%s219 + $0x1a8] sm:$0xff]
        %v290 = vld [vmem:[%s219 + $0x1b0] sm:$0xff]
        %v291 = vld [vmem:[%s219 + $0x1b8] sm:$0xff]
        %v292 = vld [vmem:[%s219 + $0x1c0] sm:$0xff]
        %v293 = vld [vmem:[%s219 + $0x1c8] sm:$0xff]
        %v294 = vld [vmem:[%s219 + $0x1d0] sm:$0xff]
        %v295 = vld [vmem:[%s219 + $0x1d8] sm:$0xff]
        %v296 = vld [vmem:[%s219 + $0x1e0] sm:$0xff]
        %v297 = vld [vmem:[%s219 + $0x1e8] sm:$0xff]
        %v298 = vld [vmem:[%s219 + $0x1f0] sm:$0xff]
        %v299 = vld [vmem:[%s219 + $0x1f8] sm:$0xff]
        %v300 = vld [vmem:[%s219 + $0x200] sm:$0xff]
        %v301 = vld [vmem:[%s219 + $0x208] sm:$0xff]
        %v302 = vld [vmem:[%s219 + $0x210] sm:$0xff]
        %v303 = vld [vmem:[%s219 + $0x218] sm:$0xff]
        %v304 = vld [vmem:[%s219 + $0x220] sm:$0xff]
        %v305 = vld [vmem:[%s219 + $0x228] sm:$0xff]
        %v306 = vld [vmem:[%s219 + $0x230] sm:$0xff]
        %v307 = vld [vmem:[%s219 + $0x238] sm:$0xff]
        %v308 = vld [vmem:[%s219 + $0x240] sm:$0xff]
        %v309 = vld [vmem:[%s219 + $0x248] sm:$0xff]
        %v310 = vld [vmem:[%s219 + $0x250] sm:$0xff]
        %v311 = vld [vmem:[%s219 + $0x258] sm:$0xff]
        %v312 = vld [vmem:[%s219 + $0x260] sm:$0xff]
        %v313 = vld [vmem:[%s219 + $0x268] sm:$0xff]
        %v314 = vld [vmem:[%s219 + $0x270] sm:$0xff]
        %v315 = vld [vmem:[%s219 + $0x278] sm:$0xff]
        %v316 = vld [vmem:[%s219 + $0x280] sm:$0xff]
        %v317 = vld [vmem:[%s219 + $0x288] sm:$0xff]
        %v318 = vld [vmem:[%s219 + $0x290] sm:$0xff]
        %v319 = vld [vmem:[%s219 + $0x298] sm:$0xff]
        %v320 = vld [vmem:[%s219 + $0x2a0] sm:$0xff]
        %v321 = vld [vmem:[%s219 + $0x2a8] sm:$0xff]
        %v322 = vld [vmem:[%s219 + $0x2b0] sm:$0xff]
        %v323 = vld [vmem:[%s219 + $0x2b8] sm:$0xff]
        %v324 = vld [vmem:[%s219 + $0x2c0] sm:$0xff]
        %v325 = vld [vmem:[%s219 + $0x2c8] sm:$0xff]
        %v326 = vld [vmem:[%s219 + $0x2d0] sm:$0xff]
        %v327 = vld [vmem:[%s219 + $0x2d8] sm:$0xff]
        %v328 = vld [vmem:[%s219 + $0x2e0] sm:$0xff]
        %v329 = vld [vmem:[%s219 + $0x2e8] sm:$0xff]
        %v330 = vld [vmem:[%s219 + $0x2f0] sm:$0xff]
        %v331 = vld [vmem:[%s219 + $0x2f8] sm:$0xff]
        %v332 = vld [vmem:[%s219 + $0x300] sm:$0xff]
        %v333 = vld [vmem:[%s219 + $0x308] sm:$0xff]
        %v334 = vld [vmem:[%s219 + $0x310] sm:$0xff]
        %v335 = vld [vmem:[%s219 + $0x318] sm:$0xff]
        %v336 = vld [vmem:[%s219 + $0x320] sm:$0xff]
        %v337 = vld [vmem:[%s219 + $0x328] sm:$0xff]
        %v338 = vld [vmem:[%s219 + $0x330] sm:$0xff]
        %v339 = vld [vmem:[%s219 + $0x338] sm:$0xff]
        %v340 = vld [vmem:[%s219 + $0x340] sm:$0xff]
        %v341 = vld [vmem:[%s219 + $0x348] sm:$0xff]
        %v342 = vld [vmem:[%s219 + $0x350] sm:$0xff]
        %v343 = vld [vmem:[%s219 + $0x358] sm:$0xff]
        %v344 = vld [vmem:[%s219 + $0x360] sm:$0xff]
        %v345 = vld [vmem:[%s219 + $0x368] sm:$0xff]
        %v346 = vld [vmem:[%s219 + $0x370] sm:$0xff]
        %v347 = vld [vmem:[%s219 + $0x378] sm:$0xff]
        %v348 = vld [vmem:[%s219 + $0x380] sm:$0xff]
        %v349 = vld [vmem:[%s219 + $0x388] sm:$0xff]
        %v350 = vld [vmem:[%s219 + $0x390] sm:$0xff]
        %v351 = vld [vmem:[%s219 + $0x398] sm:$0xff]
        %v352 = vld [vmem:[%s219 + $0x3a0] sm:$0xff]
        %v353 = vld [vmem:[%s219 + $0x3a8] sm:$0xff]
        %v354 = vld [vmem:[%s219 + $0x3b0] sm:$0xff]
        %v355 = vld [vmem:[%s219 + $0x3b8] sm:$0xff]
        %v356 = vld [vmem:[%s219 + $0x3c0] sm:$0xff]
        %v357 = vld [vmem:[%s219 + $0x3c8] sm:$0xff]
        %v358 = vld [vmem:[%s219 + $0x3d0] sm:$0xff]
        %v359 = vld [vmem:[%s219 + $0x3d8] sm:$0xff]
        %v360 = vld [vmem:[%s219 + $0x3e0] sm:$0xff]
        %v361 = vld [vmem:[%s219 + $0x3e8] sm:$0xff]
        %v362 = vld [vmem:[%s219 + $0x3f0] sm:$0xff]
        %v363 = vld [vmem:[%s219 + $0x3f8] sm:$0xff]
        %v364 = vld [vmem:[%s219 + $0x400] sm:$0xff]
        %v365 = vld [vmem:[%s219 + $0x408] sm:$0xff]
        %v366 = vld [vmem:[%s219 + $0x410] sm:$0xff]
        %v367 = vld [vmem:[%s219 + $0x418] sm:$0xff]
        %v368 = vld [vmem:[%s219 + $0x420] sm:$0xff]
        %v369 = vld [vmem:[%s219 + $0x428] sm:$0xff]
        %v370 = vld [vmem:[%s219 + $0x430] sm:$0xff]
        %v371 = vld [vmem:[%s219 + $0x438] sm:$0xff]
        %v372 = vld [vmem:[%s219 + $0x440] sm:$0xff]
        %v373 = vld [vmem:[%s219 + $0x448] sm:$0xff]
        %v374 = vld [vmem:[%s219 + $0x450] sm:$0xff]
        %v375 = vld [vmem:[%s219 + $0x458] sm:$0xff]
        %v376 = vld [vmem:[%s219 + $0x460] sm:$0xff]
        %v377 = vld [vmem:[%s219 + $0x468] sm:$0xff]
        %v378 = vld [vmem:[%s219 + $0x470] sm:$0xff]
        %v379 = vld [vmem:[%s219 + $0x478] sm:$0xff]
        %v380 = vld [vmem:[%s219 + $0x480] sm:$0xff]
        %v381 = vld [vmem:[%s219 + $0x488] sm:$0xff]
        %v382 = vld [vmem:[%s219 + $0x490] sm:$0xff]
        %v383 = vld [vmem:[%s219 + $0x498] sm:$0xff]
        %v384 = vld [vmem:[%s219 + $0x4a0] sm:$0xff]
        %v385 = vld [vmem:[%s219 + $0x4a8] sm:$0xff]
        %v386 = vld [vmem:[%s219 + $0x4b0] sm:$0xff]
        %v387 = vld [vmem:[%s219 + $0x4b8] sm:$0xff]
        %v388 = vld [vmem:[%s219 + $0x4c0] sm:$0xff]
        %v389 = vld [vmem:[%s219 + $0x4c8] sm:$0xff]
        %v390 = vld [vmem:[%s219 + $0x4d0] sm:$0xff]
        %v391 = vld [vmem:[%s219 + $0x4d8] sm:$0xff]
        %v392 = vld [vmem:[%s219 + $0x4e0] sm:$0xff]
        %v393 = vld [vmem:[%s219 + $0x4e8] sm:$0xff]
        %v394 = vld [vmem:[%s219 + $0x4f0] sm:$0xff]
        %v395 = vld [vmem:[%s219 + $0x4f8] sm:$0xff]
        %v396 = vld [vmem:[%s219 + $0x500] sm:$0xff]
        %v397 = vld [vmem:[%s219 + $0x508] sm:$0xff]
        %v398 = vld [vmem:[%s219 + $0x510] sm:$0xff]
        %v399 = vld [vmem:[%s219 + $0x518] sm:$0xff]
        %v400 = vld [vmem:[%s219 + $0x520] sm:$0xff]
        %v401 = vld [vmem:[%s219 + $0x528] sm:$0xff]
        %v402 = vld [vmem:[%s219 + $0x530] sm:$0xff]
        %v403 = vld [vmem:[%s219 + $0x538] sm:$0xff]
        %v404 = vld [vmem:[%s219 + $0x540] sm:$0xff]
        %v405 = vld [vmem:[%s219 + $0x548] sm:$0xff]
        %v406 = vld [vmem:[%s219 + $0x550] sm:$0xff]
        %v407 = vld [vmem:[%s219 + $0x558] sm:$0xff]
        %v408 = vld [vmem:[%s219 + $0x560] sm:$0xff]
        %v409 = vld [vmem:[%s219 + $0x568] sm:$0xff]
        %v410 = vld [vmem:[%s219 + $0x570] sm:$0xff]
        %v411 = vld [vmem:[%s219 + $0x578] sm:$0xff]
        %v412 = vld [vmem:[%s219 + $0x580] sm:$0xff]
        %v413 = vld [vmem:[%s219 + $0x588] sm:$0xff]
        %v414 = vld [vmem:[%s219 + $0x590] sm:$0xff]
        %v415 = vld [vmem:[%s219 + $0x598] sm:$0xff]
        %v416 = vld [vmem:[%s219 + $0x5a0] sm:$0xff]
        %v417 = vld [vmem:[%s219 + $0x5a8] sm:$0xff]
        %v418 = vld [vmem:[%s219 + $0x5b0] sm:$0xff]
        %v419 = vld [vmem:[%s219 + $0x5b8] sm:$0xff]
        %v420 = vld [vmem:[%s219 + $0x5c0] sm:$0xff]
        %v421 = vld [vmem:[%s219 + $0x5c8] sm:$0xff]
        %v422 = vld [vmem:[%s219 + $0x5d0] sm:$0xff]
        %v423 = vld [vmem:[%s219 + $0x5d8] sm:$0xff]
        %v424 = vld [vmem:[%s219 + $0x5e0] sm:$0xff]
        %v425 = vld [vmem:[%s219 + $0x5e8] sm:$0xff]
        %v426 = vld [vmem:[%s219 + $0x5f0] sm:$0xff]
        %v427 = vld [vmem:[%s219 + $0x5f8] sm:$0xff]
        %v428 = vstv %s234
        %v429 = vmul.f32 %v428, %v236
        %v430 = vmul.f32 %v428, %v237
        %v431 = vmul.f32 %v428, %v238
        %v432 = vmul.f32 %v428, %v239
        %v433 = vmul.f32 %v428, %v240
        %v434 = vmul.f32 %v428, %v241
        %v435 = vmul.f32 %v428, %v242
        %v436 = vmul.f32 %v428, %v243
        %v437 = vmul.f32 %v428, %v244
        %v438 = vmul.f32 %v428, %v245
        %v439 = vmul.f32 %v428, %v246
        %v440 = vmul.f32 %v428, %v247
        %v441 = vmul.f32 %v428, %v248
        %v442 = vmul.f32 %v428, %v249
        %v443 = vmul.f32 %v428, %v250
        %v444 = vmul.f32 %v428, %v251
        %v445 = vmul.f32 %v428, %v252
        %v446 = vmul.f32 %v428, %v253
        %v447 = vmul.f32 %v428, %v254
        %v448 = vmul.f32 %v428, %v255
        %v449 = vmul.f32 %v428, %v256
        %v450 = vmul.f32 %v428, %v257
        %v451 = vmul.f32 %v428, %v258
        %v452 = vmul.f32 %v428, %v259
        %v453 = vmul.f32 %v428, %v260
        %v454 = vmul.f32 %v428, %v261
        %v455 = vmul.f32 %v428, %v262
        %v456 = vmul.f32 %v428, %v263
        %v457 = vmul.f32 %v428, %v264
        %v458 = vmul.f32 %v428, %v265
        %v459 = vmul.f32 %v428, %v266
        %v460 = vmul.f32 %v428, %v267
        %v461 = vmul.f32 %v428, %v268
        %v462 = vmul.f32 %v428, %v269
        %v463 = vmul.f32 %v428, %v270
        %v464 = vmul.f32 %v428, %v271
        %v465 = vmul.f32 %v428, %v272
        %v466 = vmul.f32 %v428, %v273
        %v467 = vmul.f32 %v428, %v274
        %v468 = vmul.f32 %v428, %v275
        %v469 = vmul.f32 %v428, %v276
        %v470 = vmul.f32 %v428, %v277
        %v471 = vmul.f32 %v428, %v278
        %v472 = vmul.f32 %v428, %v279
        %v473 = vmul.f32 %v428, %v280
        %v474 = vmul.f32 %v428, %v281
        %v475 = vmul.f32 %v428, %v282
        %v476 = vmul.f32 %v428, %v283
        %v477 = vmul.f32 %v428, %v284
        %v478 = vmul.f32 %v428, %v285
        %v479 = vmul.f32 %v428, %v286
        %v480 = vmul.f32 %v428, %v287
        %v481 = vmul.f32 %v428, %v288
        %v482 = vmul.f32 %v428, %v289
        %v483 = vmul.f32 %v428, %v290
        %v484 = vmul.f32 %v428, %v291
        %v485 = vmul.f32 %v428, %v292
        %v486 = vmul.f32 %v428, %v293
        %v487 = vmul.f32 %v428, %v294
        %v488 = vmul.f32 %v428, %v295
        %v489 = vmul.f32 %v428, %v296
        %v490 = vmul.f32 %v428, %v297
        %v491 = vmul.f32 %v428, %v298
        %v492 = vmul.f32 %v428, %v299
        %v493 = vmul.f32 %v428, %v300
        %v494 = vmul.f32 %v428, %v301
        %v495 = vmul.f32 %v428, %v302
        %v496 = vmul.f32 %v428, %v303
        %v497 = vmul.f32 %v428, %v304
        %v498 = vmul.f32 %v428, %v305
        %v499 = vmul.f32 %v428, %v306
        %v500 = vmul.f32 %v428, %v307
        %v501 = vmul.f32 %v428, %v308
        %v502 = vmul.f32 %v428, %v309
        %v503 = vmul.f32 %v428, %v310
        %v504 = vmul.f32 %v428, %v311
        %v505 = vmul.f32 %v428, %v312
        %v506 = vmul.f32 %v428, %v313
        %v507 = vmul.f32 %v428, %v314
        %v508 = vmul.f32 %v428, %v315
        %v509 = vmul.f32 %v428, %v316
        %v510 = vmul.f32 %v428, %v317
        %v511 = vmul.f32 %v428, %v318
        %v512 = vmul.f32 %v428, %v319
        %v513 = vmul.f32 %v428, %v320
        %v514 = vmul.f32 %v428, %v321
        %v515 = vmul.f32 %v428, %v322
        %v516 = vmul.f32 %v428, %v323
        %v517 = vmul.f32 %v428, %v324
        %v518 = vmul.f32 %v428, %v325
        %v519 = vmul.f32 %v428, %v326
        %v520 = vmul.f32 %v428, %v327
        %v521 = vmul.f32 %v428, %v328
        %v522 = vmul.f32 %v428, %v329
        %v523 = vmul.f32 %v428, %v330
        %v524 = vmul.f32 %v428, %v331
        %v525 = vmul.f32 %v428, %v332
        %v526 = vmul.f32 %v428, %v333
        %v527 = vmul.f32 %v428, %v334
        %v528 = vmul.f32 %v428, %v335
        %v529 = vmul.f32 %v428, %v336
        %v530 = vmul.f32 %v428, %v337
        %v531 = vmul.f32 %v428, %v338
        %v532 = vmul.f32 %v428, %v339
        %v533 = vmul.f32 %v428, %v340
        %v534 = vmul.f32 %v428, %v341
        %v535 = vmul.f32 %v428, %v342
        %v536 = vmul.f32 %v428, %v343
        %v537 = vmul.f32 %v428, %v344
        %v538 = vmul.f32 %v428, %v345
        %v539 = vmul.f32 %v428, %v346
        %v540 = vmul.f32 %v428, %v347
        %v541 = vmul.f32 %v428, %v348
        %v542 = vmul.f32 %v428, %v349
        %v543 = vmul.f32 %v428, %v350
        %v544 = vmul.f32 %v428, %v351
        %v545 = vmul.f32 %v428, %v352
        %v546 = vmul.f32 %v428, %v353
        %v547 = vmul.f32 %v428, %v354
        %v548 = vmul.f32 %v428, %v355
        %v549 = vmul.f32 %v428, %v356
        %v550 = vmul.f32 %v428, %v357
        %v551 = vmul.f32 %v428, %v358
        %v552 = vmul.f32 %v428, %v359
        %v553 = vmul.f32 %v428, %v360
        %v554 = vmul.f32 %v428, %v361
        %v555 = vmul.f32 %v428, %v362
        %v556 = vmul.f32 %v428, %v363
        %v557 = vmul.f32 %v428, %v364
        %v558 = vmul.f32 %v428, %v365
        %v559 = vmul.f32 %v428, %v366
        %v560 = vmul.f32 %v428, %v367
        %v561 = vmul.f32 %v428, %v368
        %v562 = vmul.f32 %v428, %v369
        %v563 = vmul.f32 %v428, %v370
        %v564 = vmul.f32 %v428, %v371
        %v565 = vmul.f32 %v428, %v372
        %v566 = vmul.f32 %v428, %v373
        %v567 = vmul.f32 %v428, %v374
        %v568 = vmul.f32 %v428, %v375
        %v569 = vmul.f32 %v428, %v376
        %v570 = vmul.f32 %v428, %v377
        %v571 = vmul.f32 %v428, %v378
        %v572 = vmul.f32 %v428, %v379
        %v573 = vmul.f32 %v428, %v380
        %v574 = vmul.f32 %v428, %v381
        %v575 = vmul.f32 %v428, %v382
        %v576 = vmul.f32 %v428, %v383
        %v577 = vmul.f32 %v428, %v384
        %v578 = vmul.f32 %v428, %v385
        %v579 = vmul.f32 %v428, %v386
        %v580 = vmul.f32 %v428, %v387
        %v581 = vmul.f32 %v428, %v388
        %v582 = vmul.f32 %v428, %v389
        %v583 = vmul.f32 %v428, %v390
        %v584 = vmul.f32 %v428, %v391
        %v585 = vmul.f32 %v428, %v392
        %v586 = vmul.f32 %v428, %v393
        %v587 = vmul.f32 %v428, %v394
        %v588 = vmul.f32 %v428, %v395
        %v589 = vmul.f32 %v428, %v396
        %v590 = vmul.f32 %v428, %v397
        %v591 = vmul.f32 %v428, %v398
        %v592 = vmul.f32 %v428, %v399
        %v593 = vmul.f32 %v428, %v400
        %v594 = vmul.f32 %v428, %v401
        %v595 = vmul.f32 %v428, %v402
        %v596 = vmul.f32 %v428, %v403
        %v597 = vmul.f32 %v428, %v404
        %v598 = vmul.f32 %v428, %v405
        %v599 = vmul.f32 %v428, %v406
        %v600 = vmul.f32 %v428, %v407
        %v601 = vmul.f32 %v428, %v408
        %v602 = vmul.f32 %v428, %v409
        %v603 = vmul.f32 %v428, %v410
        %v604 = vmul.f32 %v428, %v411
        %v605 = vmul.f32 %v428, %v412
        %v606 = vmul.f32 %v428, %v413
        %v607 = vmul.f32 %v428, %v414
        %v608 = vmul.f32 %v428, %v415
        %v609 = vmul.f32 %v428, %v416
        %v610 = vmul.f32 %v428, %v417
        %v611 = vmul.f32 %v428, %v418
        %v612 = vmul.f32 %v428, %v419
        %v613 = vmul.f32 %v428, %v420
        %v614 = vmul.f32 %v428, %v421
        %v615 = vmul.f32 %v428, %v422
        %v616 = vmul.f32 %v428, %v423
        %v617 = vmul.f32 %v428, %v424
        %v618 = vmul.f32 %v428, %v425
        %v619 = vmul.f32 %v428, %v426
        %v620 = vmul.f32 %v428, %v427
        %v621 = vstv %s235
        %v622 = vadd.f32 %v429, %v621
        %v623 = vadd.f32 %v430, %v621
        %v624 = vadd.f32 %v431, %v621
        %v625 = vadd.f32 %v432, %v621
        %v626 = vadd.f32 %v433, %v621
        %v627 = vadd.f32 %v434, %v621
        %v628 = vadd.f32 %v435, %v621
        %v629 = vadd.f32 %v436, %v621
        %v630 = vadd.f32 %v437, %v621
        %v631 = vadd.f32 %v438, %v621
        %v632 = vadd.f32 %v439, %v621
        %v633 = vadd.f32 %v440, %v621
        %v634 = vadd.f32 %v441, %v621
        %v635 = vadd.f32 %v442, %v621
        %v636 = vadd.f32 %v443, %v621
        %v637 = vadd.f32 %v444, %v621
        %v638 = vadd.f32 %v445, %v621
        %v639 = vadd.f32 %v446, %v621
        %v640 = vadd.f32 %v447, %v621
        %v641 = vadd.f32 %v448, %v621
        %v642 = vadd.f32 %v449, %v621
        %v643 = vadd.f32 %v450, %v621
        %v644 = vadd.f32 %v451, %v621
        %v645 = vadd.f32 %v452, %v621
        %v646 = vadd.f32 %v453, %v621
        %v647 = vadd.f32 %v454, %v621
        %v648 = vadd.f32 %v455, %v621
        %v649 = vadd.f32 %v456, %v621
        %v650 = vadd.f32 %v457, %v621
        %v651 = vadd.f32 %v458, %v621
        %v652 = vadd.f32 %v459, %v621
        %v653 = vadd.f32 %v460, %v621
        %v654 = vadd.f32 %v461, %v621
        %v655 = vadd.f32 %v462, %v621
        %v656 = vadd.f32 %v463, %v621
        %v657 = vadd.f32 %v464, %v621
        %v658 = vadd.f32 %v465, %v621
        %v659 = vadd.f32 %v466, %v621
        %v660 = vadd.f32 %v467, %v621
        %v661 = vadd.f32 %v468, %v621
        %v662 = vadd.f32 %v469, %v621
        %v663 = vadd.f32 %v470, %v621
        %v664 = vadd.f32 %v471, %v621
        %v665 = vadd.f32 %v472, %v621
        %v666 = vadd.f32 %v473, %v621
        %v667 = vadd.f32 %v474, %v621
        %v668 = vadd.f32 %v475, %v621
        %v669 = vadd.f32 %v476, %v621
        %v670 = vadd.f32 %v477, %v621
        %v671 = vadd.f32 %v478, %v621
        %v672 = vadd.f32 %v479, %v621
        %v673 = vadd.f32 %v480, %v621
        %v674 = vadd.f32 %v481, %v621
        %v675 = vadd.f32 %v482, %v621
        %v676 = vadd.f32 %v483, %v621
        %v677 = vadd.f32 %v484, %v621
        %v678 = vadd.f32 %v485, %v621
        %v679 = vadd.f32 %v486, %v621
        %v680 = vadd.f32 %v487, %v621
        %v681 = vadd.f32 %v488, %v621
        %v682 = vadd.f32 %v489, %v621
        %v683 = vadd.f32 %v490, %v621
        %v684 = vadd.f32 %v491, %v621
        %v685 = vadd.f32 %v492, %v621
        %v686 = vadd.f32 %v493, %v621
        %v687 = vadd.f32 %v494, %v621
        %v688 = vadd.f32 %v495, %v621
        %v689 = vadd.f32 %v496, %v621
        %v690 = vadd.f32 %v497, %v621
        %v691 = vadd.f32 %v498, %v621
        %v692 = vadd.f32 %v499, %v621
        %v693 = vadd.f32 %v500, %v621
        %v694 = vadd.f32 %v501, %v621
        %v695 = vadd.f32 %v502, %v621
        %v696 = vadd.f32 %v503, %v621
        %v697 = vadd.f32 %v504, %v621
        %v698 = vadd.f32 %v505, %v621
        %v699 = vadd.f32 %v506, %v621
        %v700 = vadd.f32 %v507, %v621
        %v701 = vadd.f32 %v508, %v621
        %v702 = vadd.f32 %v509, %v621
        %v703 = vadd.f32 %v510, %v621
        %v704 = vadd.f32 %v511, %v621
        %v705 = vadd.f32 %v512, %v621
        %v706 = vadd.f32 %v513, %v621
        %v707 = vadd.f32 %v514, %v621
        %v708 = vadd.f32 %v515, %v621
        %v709 = vadd.f32 %v516, %v621
        %v710 = vadd.f32 %v517, %v621
        %v711 = vadd.f32 %v518, %v621
        %v712 = vadd.f32 %v519, %v621
        %v713 = vadd.f32 %v520, %v621
        %v714 = vadd.f32 %v521, %v621
        %v715 = vadd.f32 %v522, %v621
        %v716 = vadd.f32 %v523, %v621
        %v717 = vadd.f32 %v524, %v621
        %v718 = vadd.f32 %v525, %v621
        %v719 = vadd.f32 %v526, %v621
        %v720 = vadd.f32 %v527, %v621
        %v721 = vadd.f32 %v528, %v621
        %v722 = vadd.f32 %v529, %v621
        %v723 = vadd.f32 %v530, %v621
        %v724 = vadd.f32 %v531, %v621
        %v725 = vadd.f32 %v532, %v621
        %v726 = vadd.f32 %v533, %v621
        %v727 = vadd.f32 %v534, %v621
        %v728 = vadd.f32 %v535, %v621
        %v729 = vadd.f32 %v536, %v621
        %v730 = vadd.f32 %v537, %v621
        %v731 = vadd.f32 %v538, %v621
        %v732 = vadd.f32 %v539, %v621
        %v733 = vadd.f32 %v540, %v621
        %v734 = vadd.f32 %v541, %v621
        %v735 = vadd.f32 %v542, %v621
        %v736 = vadd.f32 %v543, %v621
        %v737 = vadd.f32 %v544, %v621
        %v738 = vadd.f32 %v545, %v621
        %v739 = vadd.f32 %v546, %v621
        %v740 = vadd.f32 %v547, %v621
        %v741 = vadd.f32 %v548, %v621
        %v742 = vadd.f32 %v549, %v621
        %v743 = vadd.f32 %v550, %v621
        %v744 = vadd.f32 %v551, %v621
        %v745 = vadd.f32 %v552, %v621
        %v746 = vadd.f32 %v553, %v621
        %v747 = vadd.f32 %v554, %v621
        %v748 = vadd.f32 %v555, %v621
        %v749 = vadd.f32 %v556, %v621
        %v750 = vadd.f32 %v557, %v621
        %v751 = vadd.f32 %v558, %v621
        %v752 = vadd.f32 %v559, %v621
        %v753 = vadd.f32 %v560, %v621
        %v754 = vadd.f32 %v561, %v621
        %v755 = vadd.f32 %v562, %v621
        %v756 = vadd.f32 %v563, %v621
        %v757 = vadd.f32 %v564, %v621
        %v758 = vadd.f32 %v565, %v621
        %v759 = vadd.f32 %v566, %v621
        %v760 = vadd.f32 %v567, %v621
        %v761 = vadd.f32 %v568, %v621
        %v762 = vadd.f32 %v569, %v621
        %v763 = vadd.f32 %v570, %v621
        %v764 = vadd.f32 %v571, %v621
        %v765 = vadd.f32 %v572, %v621
        %v766 = vadd.f32 %v573, %v621
        %v767 = vadd.f32 %v574, %v621
        %v768 = vadd.f32 %v575, %v621
        %v769 = vadd.f32 %v576, %v621
        %v770 = vadd.f32 %v577, %v621
        %v771 = vadd.f32 %v578, %v621
        %v772 = vadd.f32 %v579, %v621
        %v773 = vadd.f32 %v580, %v621
        %v774 = vadd.f32 %v581, %v621
        %v775 = vadd.f32 %v582, %v621
        %v776 = vadd.f32 %v583, %v621
        %v777 = vadd.f32 %v584, %v621
        %v778 = vadd.f32 %v585, %v621
        %v779 = vadd.f32 %v586, %v621
        %v780 = vadd.f32 %v587, %v621
        %v781 = vadd.f32 %v588, %v621
        %v782 = vadd.f32 %v589, %v621
        %v783 = vadd.f32 %v590, %v621
        %v784 = vadd.f32 %v591, %v621
        %v785 = vadd.f32 %v592, %v621
        %v786 = vadd.f32 %v593, %v621
        %v787 = vadd.f32 %v594, %v621
        %v788 = vadd.f32 %v595, %v621
        %v789 = vadd.f32 %v596, %v621
        %v790 = vadd.f32 %v597, %v621
        %v791 = vadd.f32 %v598, %v621
        %v792 = vadd.f32 %v599, %v621
        %v793 = vadd.f32 %v600, %v621
        %v794 = vadd.f32 %v601, %v621
        %v795 = vadd.f32 %v602, %v621
        %v796 = vadd.f32 %v603, %v621
        %v797 = vadd.f32 %v604, %v621
        %v798 = vadd.f32 %v605, %v621
        %v799 = vadd.f32 %v606, %v621
        %v800 = vadd.f32 %v607, %v621
        %v801 = vadd.f32 %v608, %v621
        %v802 = vadd.f32 %v609, %v621
        %v803 = vadd.f32 %v610, %v621
        %v804 = vadd.f32 %v611, %v621
        %v805 = vadd.f32 %v612, %v621
        %v806 = vadd.f32 %v613, %v621
        %v807 = vadd.f32 %v614, %v621
        %v808 = vadd.f32 %v615, %v621
        %v809 = vadd.f32 %v616, %v621
        %v810 = vadd.f32 %v617, %v621
        %v811 = vadd.f32 %v618, %v621
        %v812 = vadd.f32 %v619, %v621
        %v813 = vadd.f32 %v620, %v621
        %814 = vst [vmem:[%s204] sm:$0xff] %v622
        %815 = vst [vmem:[%s204 + $0x8] sm:$0xff] %v623
        %816 = vst [vmem:[%s204 + $0x10] sm:$0xff] %v624
        %817 = vst [vmem:[%s204 + $0x18] sm:$0xff] %v625
        %818 = vst [vmem:[%s204 + $0x20] sm:$0xff] %v626
        %819 = vst [vmem:[%s204 + $0x28] sm:$0xff] %v627
        %820 = vst [vmem:[%s204 + $0x30] sm:$0xff] %v628
        %821 = vst [vmem:[%s204 + $0x38] sm:$0xff] %v629
        %822 = vst [vmem:[%s204 + $0x40] sm:$0xff] %v630
        %823 = vst [vmem:[%s204 + $0x48] sm:$0xff] %v631
        %824 = vst [vmem:[%s204 + $0x50] sm:$0xff] %v632
        %825 = vst [vmem:[%s204 + $0x58] sm:$0xff] %v633
        %826 = vst [vmem:[%s204 + $0x60] sm:$0xff] %v634
        %827 = vst [vmem:[%s204 + $0x68] sm:$0xff] %v635
        %828 = vst [vmem:[%s204 + $0x70] sm:$0xff] %v636
        %829 = vst [vmem:[%s204 + $0x78] sm:$0xff] %v637
        %830 = vst [vmem:[%s204 + $0x80] sm:$0xff] %v638
        %831 = vst [vmem:[%s204 + $0x88] sm:$0xff] %v639
        %832 = vst [vmem:[%s204 + $0x90] sm:$0xff] %v640
        %833 = vst [vmem:[%s204 + $0x98] sm:$0xff] %v641
        %834 = vst [vmem:[%s204 + $0xa0] sm:$0xff] %v642
        %835 = vst [vmem:[%s204 + $0xa8] sm:$0xff] %v643
        %836 = vst [vmem:[%s204 + $0xb0] sm:$0xff] %v644
        %837 = vst [vmem:[%s204 + $0xb8] sm:$0xff] %v645
        %838 = vst [vmem:[%s204 + $0xc0] sm:$0xff] %v646
        %839 = vst [vmem:[%s204 + $0xc8] sm:$0xff] %v647
        %840 = vst [vmem:[%s204 + $0xd0] sm:$0xff] %v648
        %841 = vst [vmem:[%s204 + $0xd8] sm:$0xff] %v649
        %842 = vst [vmem:[%s204 + $0xe0] sm:$0xff] %v650
        %843 = vst [vmem:[%s204 + $0xe8] sm:$0xff] %v651
        %844 = vst [vmem:[%s204 + $0xf0] sm:$0xff] %v652
        %845 = vst [vmem:[%s204 + $0xf8] sm:$0xff] %v653
        %846 = vst [vmem:[%s204 + $0x100] sm:$0xff] %v654
        %847 = vst [vmem:[%s204 + $0x108] sm:$0xff] %v655
        %848 = vst [vmem:[%s204 + $0x110] sm:$0xff] %v656
        %849 = vst [vmem:[%s204 + $0x118] sm:$0xff] %v657
        %850 = vst [vmem:[%s204 + $0x120] sm:$0xff] %v658
        %851 = vst [vmem:[%s204 + $0x128] sm:$0xff] %v659
        %852 = vst [vmem:[%s204 + $0x130] sm:$0xff] %v660
        %853 = vst [vmem:[%s204 + $0x138] sm:$0xff] %v661
        %854 = vst [vmem:[%s204 + $0x140] sm:$0xff] %v662
        %855 = vst [vmem:[%s204 + $0x148] sm:$0xff] %v663
        %856 = vst [vmem:[%s204 + $0x150] sm:$0xff] %v664
        %857 = vst [vmem:[%s204 + $0x158] sm:$0xff] %v665
        %858 = vst [vmem:[%s204 + $0x160] sm:$0xff] %v666
        %859 = vst [vmem:[%s204 + $0x168] sm:$0xff] %v667
        %860 = vst [vmem:[%s204 + $0x170] sm:$0xff] %v668
        %861 = vst [vmem:[%s204 + $0x178] sm:$0xff] %v669
        %862 = vst [vmem:[%s204 + $0x180] sm:$0xff] %v670
        %863 = vst [vmem:[%s204 + $0x188] sm:$0xff] %v671
        %864 = vst [vmem:[%s204 + $0x190] sm:$0xff] %v672
        %865 = vst [vmem:[%s204 + $0x198] sm:$0xff] %v673
        %866 = vst [vmem:[%s204 + $0x1a0] sm:$0xff] %v674
        %867 = vst [vmem:[%s204 + $0x1a8] sm:$0xff] %v675
        %868 = vst [vmem:[%s204 + $0x1b0] sm:$0xff] %v676
        %869 = vst [vmem:[%s204 + $0x1b8] sm:$0xff] %v677
        %870 = vst [vmem:[%s204 + $0x1c0] sm:$0xff] %v678
        %871 = vst [vmem:[%s204 + $0x1c8] sm:$0xff] %v679
        %872 = vst [vmem:[%s204 + $0x1d0] sm:$0xff] %v680
        %873 = vst [vmem:[%s204 + $0x1d8] sm:$0xff] %v681
        %874 = vst [vmem:[%s204 + $0x1e0] sm:$0xff] %v682
        %875 = vst [vmem:[%s204 + $0x1e8] sm:$0xff] %v683
        %876 = vst [vmem:[%s204 + $0x1f0] sm:$0xff] %v684
        %877 = vst [vmem:[%s204 + $0x1f8] sm:$0xff] %v685
        %878 = vst [vmem:[%s204 + $0x200] sm:$0xff] %v686
        %879 = vst [vmem:[%s204 + $0x208] sm:$0xff] %v687
        %880 = vst [vmem:[%s204 + $0x210] sm:$0xff] %v688
        %881 = vst [vmem:[%s204 + $0x218] sm:$0xff] %v689
        %882 = vst [vmem:[%s204 + $0x220] sm:$0xff] %v690
        %883 = vst [vmem:[%s204 + $0x228] sm:$0xff] %v691
        %884 = vst [vmem:[%s204 + $0x230] sm:$0xff] %v692
        %885 = vst [vmem:[%s204 + $0x238] sm:$0xff] %v693
        %886 = vst [vmem:[%s204 + $0x240] sm:$0xff] %v694
        %887 = vst [vmem:[%s204 + $0x248] sm:$0xff] %v695
        %888 = vst [vmem:[%s204 + $0x250] sm:$0xff] %v696
        %889 = vst [vmem:[%s204 + $0x258] sm:$0xff] %v697
        %890 = vst [vmem:[%s204 + $0x260] sm:$0xff] %v698
        %891 = vst [vmem:[%s204 + $0x268] sm:$0xff] %v699
        %892 = vst [vmem:[%s204 + $0x270] sm:$0xff] %v700
        %893 = vst [vmem:[%s204 + $0x278] sm:$0xff] %v701
        %894 = vst [vmem:[%s204 + $0x280] sm:$0xff] %v702
        %895 = vst [vmem:[%s204 + $0x288] sm:$0xff] %v703
        %896 = vst [vmem:[%s204 + $0x290] sm:$0xff] %v704
        %897 = vst [vmem:[%s204 + $0x298] sm:$0xff] %v705
        %898 = vst [vmem:[%s204 + $0x2a0] sm:$0xff] %v706
        %899 = vst [vmem:[%s204 + $0x2a8] sm:$0xff] %v707
        %900 = vst [vmem:[%s204 + $0x2b0] sm:$0xff] %v708
        %901 = vst [vmem:[%s204 + $0x2b8] sm:$0xff] %v709
        %902 = vst [vmem:[%s204 + $0x2c0] sm:$0xff] %v710
        %903 = vst [vmem:[%s204 + $0x2c8] sm:$0xff] %v711
        %904 = vst [vmem:[%s204 + $0x2d0] sm:$0xff] %v712
        %905 = vst [vmem:[%s204 + $0x2d8] sm:$0xff] %v713
        %906 = vst [vmem:[%s204 + $0x2e0] sm:$0xff] %v714
        %907 = vst [vmem:[%s204 + $0x2e8] sm:$0xff] %v715
        %908 = vst [vmem:[%s204 + $0x2f0] sm:$0xff] %v716
        %909 = vst [vmem:[%s204 + $0x2f8] sm:$0xff] %v717
        %910 = vst [vmem:[%s204 + $0x300] sm:$0xff] %v718
        %911 = vst [vmem:[%s204 + $0x308] sm:$0xff] %v719
        %912 = vst [vmem:[%s204 + $0x310] sm:$0xff] %v720
        %913 = vst [vmem:[%s204 + $0x318] sm:$0xff] %v721
        %914 = vst [vmem:[%s204 + $0x320] sm:$0xff] %v722
        %915 = vst [vmem:[%s204 + $0x328] sm:$0xff] %v723
        %916 = vst [vmem:[%s204 + $0x330] sm:$0xff] %v724
        %917 = vst [vmem:[%s204 + $0x338] sm:$0xff] %v725
        %918 = vst [vmem:[%s204 + $0x340] sm:$0xff] %v726
        %919 = vst [vmem:[%s204 + $0x348] sm:$0xff] %v727
        %920 = vst [vmem:[%s204 + $0x350] sm:$0xff] %v728
        %921 = vst [vmem:[%s204 + $0x358] sm:$0xff] %v729
        %922 = vst [vmem:[%s204 + $0x360] sm:$0xff] %v730
        %923 = vst [vmem:[%s204 + $0x368] sm:$0xff] %v731
        %924 = vst [vmem:[%s204 + $0x370] sm:$0xff] %v732
        %925 = vst [vmem:[%s204 + $0x378] sm:$0xff] %v733
        %926 = vst [vmem:[%s204 + $0x380] sm:$0xff] %v734
        %927 = vst [vmem:[%s204 + $0x388] sm:$0xff] %v735
        %928 = vst [vmem:[%s204 + $0x390] sm:$0xff] %v736
        %929 = vst [vmem:[%s204 + $0x398] sm:$0xff] %v737
        %930 = vst [vmem:[%s204 + $0x3a0] sm:$0xff] %v738
        %931 = vst [vmem:[%s204 + $0x3a8] sm:$0xff] %v739
        %932 = vst [vmem:[%s204 + $0x3b0] sm:$0xff] %v740
        %933 = vst [vmem:[%s204 + $0x3b8] sm:$0xff] %v741
        %934 = vst [vmem:[%s204 + $0x3c0] sm:$0xff] %v742
        %935 = vst [vmem:[%s204 + $0x3c8] sm:$0xff] %v743
        %936 = vst [vmem:[%s204 + $0x3d0] sm:$0xff] %v744
        %937 = vst [vmem:[%s204 + $0x3d8] sm:$0xff] %v745
        %938 = vst [vmem:[%s204 + $0x3e0] sm:$0xff] %v746
        %939 = vst [vmem:[%s204 + $0x3e8] sm:$0xff] %v747
        %940 = vst [vmem:[%s204 + $0x3f0] sm:$0xff] %v748
        %941 = vst [vmem:[%s204 + $0x3f8] sm:$0xff] %v749
        %942 = vst [vmem:[%s204 + $0x400] sm:$0xff] %v750
        %943 = vst [vmem:[%s204 + $0x408] sm:$0xff] %v751
        %944 = vst [vmem:[%s204 + $0x410] sm:$0xff] %v752
        %945 = vst [vmem:[%s204 + $0x418] sm:$0xff] %v753
        %946 = vst [vmem:[%s204 + $0x420] sm:$0xff] %v754
        %947 = vst [vmem:[%s204 + $0x428] sm:$0xff] %v755
        %948 = vst [vmem:[%s204 + $0x430] sm:$0xff] %v756
        %949 = vst [vmem:[%s204 + $0x438] sm:$0xff] %v757
        %950 = vst [vmem:[%s204 + $0x440] sm:$0xff] %v758
        %951 = vst [vmem:[%s204 + $0x448] sm:$0xff] %v759
        %952 = vst [vmem:[%s204 + $0x450] sm:$0xff] %v760
        %953 = vst [vmem:[%s204 + $0x458] sm:$0xff] %v761
        %954 = vst [vmem:[%s204 + $0x460] sm:$0xff] %v762
        %955 = vst [vmem:[%s204 + $0x468] sm:$0xff] %v763
        %956 = vst [vmem:[%s204 + $0x470] sm:$0xff] %v764
        %957 = vst [vmem:[%s204 + $0x478] sm:$0xff] %v765
        %958 = vst [vmem:[%s204 + $0x480] sm:$0xff] %v766
        %959 = vst [vmem:[%s204 + $0x488] sm:$0xff] %v767
        %960 = vst [vmem:[%s204 + $0x490] sm:$0xff] %v768
        %961 = vst [vmem:[%s204 + $0x498] sm:$0xff] %v769
        %962 = vst [vmem:[%s204 + $0x4a0] sm:$0xff] %v770
        %963 = vst [vmem:[%s204 + $0x4a8] sm:$0xff] %v771
        %964 = vst [vmem:[%s204 + $0x4b0] sm:$0xff] %v772
        %965 = vst [vmem:[%s204 + $0x4b8] sm:$0xff] %v773
        %966 = vst [vmem:[%s204 + $0x4c0] sm:$0xff] %v774
        %967 = vst [vmem:[%s204 + $0x4c8] sm:$0xff] %v775
        %968 = vst [vmem:[%s204 + $0x4d0] sm:$0xff] %v776
        %969 = vst [vmem:[%s204 + $0x4d8] sm:$0xff] %v777
        %970 = vst [vmem:[%s204 + $0x4e0] sm:$0xff] %v778
        %971 = vst [vmem:[%s204 + $0x4e8] sm:$0xff] %v779
        %972 = vst [vmem:[%s204 + $0x4f0] sm:$0xff] %v780
        %973 = vst [vmem:[%s204 + $0x4f8] sm:$0xff] %v781
        %974 = vst [vmem:[%s204 + $0x500] sm:$0xff] %v782
        %975 = vst [vmem:[%s204 + $0x508] sm:$0xff] %v783
        %976 = vst [vmem:[%s204 + $0x510] sm:$0xff] %v784
        %977 = vst [vmem:[%s204 + $0x518] sm:$0xff] %v785
        %978 = vst [vmem:[%s204 + $0x520] sm:$0xff] %v786
        %979 = vst [vmem:[%s204 + $0x528] sm:$0xff] %v787
        %980 = vst [vmem:[%s204 + $0x530] sm:$0xff] %v788
        %981 = vst [vmem:[%s204 + $0x538] sm:$0xff] %v789
        %982 = vst [vmem:[%s204 + $0x540] sm:$0xff] %v790
        %983 = vst [vmem:[%s204 + $0x548] sm:$0xff] %v791
        %984 = vst [vmem:[%s204 + $0x550] sm:$0xff] %v792
        %985 = vst [vmem:[%s204 + $0x558] sm:$0xff] %v793
        %986 = vst [vmem:[%s204 + $0x560] sm:$0xff] %v794
        %987 = vst [vmem:[%s204 + $0x568] sm:$0xff] %v795
        %988 = vst [vmem:[%s204 + $0x570] sm:$0xff] %v796
        %989 = vst [vmem:[%s204 + $0x578] sm:$0xff] %v797
        %990 = vst [vmem:[%s204 + $0x580] sm:$0xff] %v798
        %991 = vst [vmem:[%s204 + $0x588] sm:$0xff] %v799
        %992 = vst [vmem:[%s204 + $0x590] sm:$0xff] %v800
        %993 = vst [vmem:[%s204 + $0x598] sm:$0xff] %v801
        %994 = vst [vmem:[%s204 + $0x5a0] sm:$0xff] %v802
        %995 = vst [vmem:[%s204 + $0x5a8] sm:$0xff] %v803
        %996 = vst [vmem:[%s204 + $0x5b0] sm:$0xff] %v804
        %997 = vst [vmem:[%s204 + $0x5b8] sm:$0xff] %v805
        %998 = vst [vmem:[%s204 + $0x5c0] sm:$0xff] %v806
        %999 = vst [vmem:[%s204 + $0x5c8] sm:$0xff] %v807
        %1000 = vst [vmem:[%s204 + $0x5d0] sm:$0xff] %v808
        %1001 = vst [vmem:[%s204 + $0x5d8] sm:$0xff] %v809
        %1002 = vst [vmem:[%s204 + $0x5e0] sm:$0xff] %v810
        %1003 = vst [vmem:[%s204 + $0x5e8] sm:$0xff] %v811
        %1004 = vst [vmem:[%s204 + $0x5f0] sm:$0xff] %v812
        %1005 = vst [vmem:[%s204 + $0x5f8] sm:$0xff] %v813
        %s1006 = sand.u32 %s108, 1
        %s1007 = sand.u32 %s108, 1
        %s1008 = smul.addr %s1007, 1536
        %s1009 = scalar_lea.vmem [#allocation4], %s1008
        // Predicated region
        $region33: #{tpu_custom_call.1} parent=31 // pred_check
          %p1010 = pneg %p118
        $region34: #{tpu_custom_call.1} parent=31 // pred_check_branch
          %1012 = sbr.rel (%p1010) target = $region36
        $region35: #{tpu_custom_call.1} parent=31 // pred_region
          %s1013 = smul.u32 32, %s20
          %s1014 = smul.u32 6, %s21
          %s1015 = ssub.s32 188, %s1013
          %p1016 = scmp.lt.s32.totalorder %s1015, 32
          %s1017 = scalar_select %p1016, %s1015, 32
          %s1018 = smul.u32 128, %s1017
          %s1019 = smul.u32 %s1018, 6
          %p1020 = scmp.ne.s32.totalorder 0, %s1019
          %s1021 = smul.addr %s1013, 6
          %s1022 = sadd.s32 %s1014, %s1021
          %s1023 = smul.addr %s1022, 8
          %s1024 = scalar_lea.vmem %s3, %s1023
          // Predicated region
          $region37: #{tpu_custom_call.1} parent=35 // pred_check
            %p1025 = pneg %p1020
          $region38: #{tpu_custom_call.1} parent=35 // pred_check_branch
            %1027 = sbr.rel (%p1025) target = $region40
          $region39: #{tpu_custom_call.1} parent=35 // pred_region
            // Predicated region
            $region41: #{tpu_custom_call.1} parent=39 // pred_check
              _
            $region42: #{tpu_custom_call.1} parent=39 // pred_check_branch
              %1029 = sbr.rel (0) target = $region44
            $region43: #{tpu_custom_call.1} parent=39 // pred_region
              %s1030 = sdiv.u32.pop %s1017, 11
              %s1031 = srem.u32.pop %s1017, 11
              // While loop
              $region45: #{tpu_custom_call.1} parent=43 // loop_pre_header
                _
              $region46: #{tpu_custom_call.1} parent=43 // loop_header
                %s1033 = sphi 0, %s1035
                %p1034 = scmp.ge.s32.totalorder %s1033, %s1030
                %s1038 = sphi 0, %s1175
                %s1039 = sphi %s1009, %s1178
                %s1040 = sphi %s1024, %s1179
              $region47: #{tpu_custom_call.1} parent=43 // loop_header_branch
                %1037 = sbr.rel (%p1034) target = $region51
              $region48: #{tpu_custom_call.1} parent=43 // loop_body
                %v1041 = vld [vmem:[%s1039] sm:$0xff]
                %1042 = vst [vmem:[%s1040] sm:$0xff] %v1041
                %v1043 = vld [vmem:[%s1039 + $0x30] sm:$0xff]
                %1044 = vst [vmem:[%s1040 + $0x30] sm:$0xff] %v1043
                %v1045 = vld [vmem:[%s1039 + $0x60] sm:$0xff]
                %1046 = vst [vmem:[%s1040 + $0x60] sm:$0xff] %v1045
                %v1047 = vld [vmem:[%s1039 + $0x90] sm:$0xff]
                %1048 = vst [vmem:[%s1040 + $0x90] sm:$0xff] %v1047
                %v1049 = vld [vmem:[%s1039 + $0xc0] sm:$0xff]
                %1050 = vst [vmem:[%s1040 + $0xc0] sm:$0xff] %v1049
                %v1051 = vld [vmem:[%s1039 + $0xf0] sm:$0xff]
                %1052 = vst [vmem:[%s1040 + $0xf0] sm:$0xff] %v1051
                %v1053 = vld [vmem:[%s1039 + $0x120] sm:$0xff]
                %1054 = vst [vmem:[%s1040 + $0x120] sm:$0xff] %v1053
                %v1055 = vld [vmem:[%s1039 + $0x150] sm:$0xff]
                %1056 = vst [vmem:[%s1040 + $0x150] sm:$0xff] %v1055
                %v1057 = vld [vmem:[%s1039 + $0x180] sm:$0xff]
                %1058 = vst [vmem:[%s1040 + $0x180] sm:$0xff] %v1057
                %v1059 = vld [vmem:[%s1039 + $0x1b0] sm:$0xff]
                %1060 = vst [vmem:[%s1040 + $0x1b0] sm:$0xff] %v1059
                %v1061 = vld [vmem:[%s1039 + $0x1e0] sm:$0xff]
                %1062 = vst [vmem:[%s1040 + $0x1e0] sm:$0xff] %v1061
                %v1063 = vld [vmem:[%s1039 + $0x8] sm:$0xff]
                %1064 = vst [vmem:[%s1040 + $0x8] sm:$0xff] %v1063
                %v1065 = vld [vmem:[%s1039 + $0x38] sm:$0xff]
                %1066 = vst [vmem:[%s1040 + $0x38] sm:$0xff] %v1065
                %v1067 = vld [vmem:[%s1039 + $0x68] sm:$0xff]
                %1068 = vst [vmem:[%s1040 + $0x68] sm:$0xff] %v1067
                %v1069 = vld [vmem:[%s1039 + $0x98] sm:$0xff]
                %1070 = vst [vmem:[%s1040 + $0x98] sm:$0xff] %v1069
                %v1071 = vld [vmem:[%s1039 + $0xc8] sm:$0xff]
                %1072 = vst [vmem:[%s1040 + $0xc8] sm:$0xff] %v1071
                %v1073 = vld [vmem:[%s1039 + $0xf8] sm:$0xff]
                %1074 = vst [vmem:[%s1040 + $0xf8] sm:$0xff] %v1073
                %v1075 = vld [vmem:[%s1039 + $0x128] sm:$0xff]
                %1076 = vst [vmem:[%s1040 + $0x128] sm:$0xff] %v1075
                %v1077 = vld [vmem:[%s1039 + $0x158] sm:$0xff]
                %1078 = vst [vmem:[%s1040 + $0x158] sm:$0xff] %v1077
                %v1079 = vld [vmem:[%s1039 + $0x188] sm:$0xff]
                %1080 = vst [vmem:[%s1040 + $0x188] sm:$0xff] %v1079
                %v1081 = vld [vmem:[%s1039 + $0x1b8] sm:$0xff]
                %1082 = vst [vmem:[%s1040 + $0x1b8] sm:$0xff] %v1081
                %v1083 = vld [vmem:[%s1039 + $0x1e8] sm:$0xff]
                %1084 = vst [vmem:[%s1040 + $0x1e8] sm:$0xff] %v1083
                %v1085 = vld [vmem:[%s1039 + $0x10] sm:$0xff]
                %1086 = vst [vmem:[%s1040 + $0x10] sm:$0xff] %v1085
                %v1087 = vld [vmem:[%s1039 + $0x40] sm:$0xff]
                %1088 = vst [vmem:[%s1040 + $0x40] sm:$0xff] %v1087
                %v1089 = vld [vmem:[%s1039 + $0x70] sm:$0xff]
                %1090 = vst [vmem:[%s1040 + $0x70] sm:$0xff] %v1089
                %v1091 = vld [vmem:[%s1039 + $0xa0] sm:$0xff]
                %1092 = vst [vmem:[%s1040 + $0xa0] sm:$0xff] %v1091
                %v1093 = vld [vmem:[%s1039 + $0xd0] sm:$0xff]
                %1094 = vst [vmem:[%s1040 + $0xd0] sm:$0xff] %v1093
                %v1095 = vld [vmem:[%s1039 + $0x100] sm:$0xff]
                %1096 = vst [vmem:[%s1040 + $0x100] sm:$0xff] %v1095
                %v1097 = vld [vmem:[%s1039 + $0x130] sm:$0xff]
                %1098 = vst [vmem:[%s1040 + $0x130] sm:$0xff] %v1097
                %v1099 = vld [vmem:[%s1039 + $0x160] sm:$0xff]
                %1100 = vst [vmem:[%s1040 + $0x160] sm:$0xff] %v1099
                %v1101 = vld [vmem:[%s1039 + $0x190] sm:$0xff]
                %1102 = vst [vmem:[%s1040 + $0x190] sm:$0xff] %v1101
                %v1103 = vld [vmem:[%s1039 + $0x1c0] sm:$0xff]
                %1104 = vst [vmem:[%s1040 + $0x1c0] sm:$0xff] %v1103
                %v1105 = vld [vmem:[%s1039 + $0x1f0] sm:$0xff]
                %1106 = vst [vmem:[%s1040 + $0x1f0] sm:$0xff] %v1105
                %v1107 = vld [vmem:[%s1039 + $0x18] sm:$0xff]
                %1108 = vst [vmem:[%s1040 + $0x18] sm:$0xff] %v1107
                %v1109 = vld [vmem:[%s1039 + $0x48] sm:$0xff]
                %1110 = vst [vmem:[%s1040 + $0x48] sm:$0xff] %v1109
                %v1111 = vld [vmem:[%s1039 + $0x78] sm:$0xff]
                %1112 = vst [vmem:[%s1040 + $0x78] sm:$0xff] %v1111
                %v1113 = vld [vmem:[%s1039 + $0xa8] sm:$0xff]
                %1114 = vst [vmem:[%s1040 + $0xa8] sm:$0xff] %v1113
                %v1115 = vld [vmem:[%s1039 + $0xd8] sm:$0xff]
                %1116 = vst [vmem:[%s1040 + $0xd8] sm:$0xff] %v1115
                %v1117 = vld [vmem:[%s1039 + $0x108] sm:$0xff]
                %1118 = vst [vmem:[%s1040 + $0x108] sm:$0xff] %v1117
                %v1119 = vld [vmem:[%s1039 + $0x138] sm:$0xff]
                %1120 = vst [vmem:[%s1040 + $0x138] sm:$0xff] %v1119
                %v1121 = vld [vmem:[%s1039 + $0x168] sm:$0xff]
                %1122 = vst [vmem:[%s1040 + $0x168] sm:$0xff] %v1121
                %v1123 = vld [vmem:[%s1039 + $0x198] sm:$0xff]
                %1124 = vst [vmem:[%s1040 + $0x198] sm:$0xff] %v1123
                %v1125 = vld [vmem:[%s1039 + $0x1c8] sm:$0xff]
                %1126 = vst [vmem:[%s1040 + $0x1c8] sm:$0xff] %v1125
                %v1127 = vld [vmem:[%s1039 + $0x1f8] sm:$0xff]
                %1128 = vst [vmem:[%s1040 + $0x1f8] sm:$0xff] %v1127
                %v1129 = vld [vmem:[%s1039 + $0x20] sm:$0xff]
                %1130 = vst [vmem:[%s1040 + $0x20] sm:$0xff] %v1129
                %v1131 = vld [vmem:[%s1039 + $0x50] sm:$0xff]
                %1132 = vst [vmem:[%s1040 + $0x50] sm:$0xff] %v1131
                %v1133 = vld [vmem:[%s1039 + $0x80] sm:$0xff]
                %1134 = vst [vmem:[%s1040 + $0x80] sm:$0xff] %v1133
                %v1135 = vld [vmem:[%s1039 + $0xb0] sm:$0xff]
                %1136 = vst [vmem:[%s1040 + $0xb0] sm:$0xff] %v1135
                %v1137 = vld [vmem:[%s1039 + $0xe0] sm:$0xff]
                %1138 = vst [vmem:[%s1040 + $0xe0] sm:$0xff] %v1137
                %v1139 = vld [vmem:[%s1039 + $0x110] sm:$0xff]
                %1140 = vst [vmem:[%s1040 + $0x110] sm:$0xff] %v1139
                %v1141 = vld [vmem:[%s1039 + $0x140] sm:$0xff]
                %1142 = vst [vmem:[%s1040 + $0x140] sm:$0xff] %v1141
                %v1143 = vld [vmem:[%s1039 + $0x170] sm:$0xff]
                %1144 = vst [vmem:[%s1040 + $0x170] sm:$0xff] %v1143
                %v1145 = vld [vmem:[%s1039 + $0x1a0] sm:$0xff]
                %1146 = vst [vmem:[%s1040 + $0x1a0] sm:$0xff] %v1145
                %v1147 = vld [vmem:[%s1039 + $0x1d0] sm:$0xff]
                %1148 = vst [vmem:[%s1040 + $0x1d0] sm:$0xff] %v1147
                %v1149 = vld [vmem:[%s1039 + $0x200] sm:$0xff]
                %1150 = vst [vmem:[%s1040 + $0x200] sm:$0xff] %v1149
                %v1151 = vld [vmem:[%s1039 + $0x28] sm:$0xff]
                %1152 = vst [vmem:[%s1040 + $0x28] sm:$0xff] %v1151
                %v1153 = vld [vmem:[%s1039 + $0x58] sm:$0xff]
                %1154 = vst [vmem:[%s1040 + $0x58] sm:$0xff] %v1153
                %v1155 = vld [vmem:[%s1039 + $0x88] sm:$0xff]
                %1156 = vst [vmem:[%s1040 + $0x88] sm:$0xff] %v1155
                %v1157 = vld [vmem:[%s1039 + $0xb8] sm:$0xff]
                %1158 = vst [vmem:[%s1040 + $0xb8] sm:$0xff] %v1157
                %v1159 = vld [vmem:[%s1039 + $0xe8] sm:$0xff]
                %1160 = vst [vmem:[%s1040 + $0xe8] sm:$0xff] %v1159
                %v1161 = vld [vmem:[%s1039 + $0x118] sm:$0xff]
                %1162 = vst [vmem:[%s1040 + $0x118] sm:$0xff] %v1161
                %v1163 = vld [vmem:[%s1039 + $0x148] sm:$0xff]
                %1164 = vst [vmem:[%s1040 + $0x148] sm:$0xff] %v1163
                %v1165 = vld [vmem:[%s1039 + $0x178] sm:$0xff]
                %1166 = vst [vmem:[%s1040 + $0x178] sm:$0xff] %v1165
                %v1167 = vld [vmem:[%s1039 + $0x1a8] sm:$0xff]
                %1168 = vst [vmem:[%s1040 + $0x1a8] sm:$0xff] %v1167
                %v1169 = vld [vmem:[%s1039 + $0x1d8] sm:$0xff]
                %1170 = vst [vmem:[%s1040 + $0x1d8] sm:$0xff] %v1169
                %v1171 = vld [vmem:[%s1039 + $0x208] sm:$0xff]
                %1172 = vst [vmem:[%s1040 + $0x208] sm:$0xff] %v1171
                %s1173 = sadd.s32 1, %s1038
                %p1174 = scmp.ge.s32.totalorder %s1173, %s1030
                %s1175 = scalar_select %p1174, 0, %s1173
                %s1176 = smul.u32 %s1175, 528
                %s1177 = smul.u32 %s1175, 528
                %s1178 = scalar_lea.vmem %s1009, %s1176 [#allocation4]
                %s1179 = scalar_lea.vmem %s1024, %s1177
              $region49: #{tpu_custom_call.1} parent=43 // loop_footer
                %s1035 = sadd.s32 %s1033, 1
              $region50: #{tpu_custom_call.1} parent=43 // loop_footer_branch
                %1032 = sbr.rel target = $region46
              $region51: #{tpu_custom_call.1} parent=43 // loop_exit
                _
              %s1180 = sdiv.u32.pop %s1017, 11
              %s1181 = srem.u32.pop %s1017, 11
              %s1182 = smul.u32 %s1180, 11
              %s1183 = smul.u32 48, %s1182
              %s1184 = scalar_lea.vmem %s1009, %s1183 [#allocation4]
              %s1185 = smul.u32 48, %s1182
              %s1186 = scalar_lea.vmem %s1024, %s1185
              // While loop
              $region52: #{tpu_custom_call.1} parent=43 // loop_pre_header
                _
              $region53: #{tpu_custom_call.1} parent=43 // loop_header
                %s1188 = sphi 0, %s1190
                %p1189 = scmp.ge.s32.totalorder %s1188, %s1181
                %s1193 = sphi 0, %s1210
                %s1194 = sphi %s1184, %s1213
                %s1195 = sphi %s1186, %s1214
              $region54: #{tpu_custom_call.1} parent=43 // loop_header_branch
                %1192 = sbr.rel (%p1189) target = $region58
              $region55: #{tpu_custom_call.1} parent=43 // loop_body
                %v1196 = vld [vmem:[%s1194] sm:$0xff]
                %1197 = vst [vmem:[%s1195] sm:$0xff] %v1196
                %v1198 = vld [vmem:[%s1194 + $0x8] sm:$0xff]
                %1199 = vst [vmem:[%s1195 + $0x8] sm:$0xff] %v1198
                %v1200 = vld [vmem:[%s1194 + $0x10] sm:$0xff]
                %1201 = vst [vmem:[%s1195 + $0x10] sm:$0xff] %v1200
                %v1202 = vld [vmem:[%s1194 + $0x18] sm:$0xff]
                %1203 = vst [vmem:[%s1195 + $0x18] sm:$0xff] %v1202
                %v1204 = vld [vmem:[%s1194 + $0x20] sm:$0xff]
                %1205 = vst [vmem:[%s1195 + $0x20] sm:$0xff] %v1204
                %v1206 = vld [vmem:[%s1194 + $0x28] sm:$0xff]
                %1207 = vst [vmem:[%s1195 + $0x28] sm:$0xff] %v1206
                %s1208 = sadd.s32 1, %s1193
                %p1209 = scmp.ge.s32.totalorder %s1208, %s1181
                %s1210 = scalar_select %p1209, 0, %s1208
                %s1211 = smul.u32 %s1210, 48
                %s1212 = smul.u32 %s1210, 48
                %s1213 = scalar_lea.vmem %s1184, %s1211 [#allocation4]
                %s1214 = scalar_lea.vmem %s1186, %s1212
              $region56: #{tpu_custom_call.1} parent=43 // loop_footer
                %s1190 = sadd.s32 %s1188, 1
              $region57: #{tpu_custom_call.1} parent=43 // loop_footer_branch
                %1187 = sbr.rel target = $region53
              $region58: #{tpu_custom_call.1} parent=43 // loop_exit
                _
            $region44: #{tpu_custom_call.1} parent=39 // pred_fallthru
              _
            // Predicated region
            $region59: #{tpu_custom_call.1} parent=39 // pred_check
              _
            $region60: #{tpu_custom_call.1} parent=39 // pred_check_branch
              %1216 = sbr.rel target = $region62
            $region61: #{tpu_custom_call.1} parent=39 // pred_region
              _
            $region62: #{tpu_custom_call.1} parent=39 // pred_fallthru
              _
          $region40: #{tpu_custom_call.1} parent=35 // pred_fallthru
            _
          %1217 = vnop
        $region36: #{tpu_custom_call.1} parent=31 // pred_fallthru
          _
      $region32: #{tpu_custom_call.1} parent=5 // pred_fallthru
        _
      %p1218 = scmp.le.s32.totalorder 2, %s11
      // Predicated region
      $region63: #{tpu_custom_call.1} parent=5 // pred_check
        %p1219 = pneg %p1218
      $region64: #{tpu_custom_call.1} parent=5 // pred_check_branch
        %1221 = sbr.rel (%p1219) target = $region66
      $region65: #{tpu_custom_call.1} parent=5 // pred_region
        %s1222 = ssub.s32 %s11, 2
        // Predicated region
        $region67: #{tpu_custom_call.1} parent=65 // pred_check
          %p1223 = pneg %p124
        $region68: #{tpu_custom_call.1} parent=65 // pred_check_branch
          %1225 = sbr.rel (%p1223) target = $region70
        $region69: #{tpu_custom_call.1} parent=65 // pred_region
          %s1226 = sand.u32 %s109, 1
          %s1227 = sand.u32 %s109, 1
          %s1228 = smul.addr %s1227, 1536
          %s1229 = scalar_lea.vmem [#allocation4], %s1228
        $region70: #{tpu_custom_call.1} parent=65 // pred_fallthru
          _
      $region66: #{tpu_custom_call.1} parent=5 // pred_fallthru
        _
    $region6: #{tpu_custom_call.1} parent=1 // loop_footer
      %s15 = sadd.s32 1, %s11
    $region7: #{tpu_custom_call.1} parent=1 // loop_footer_branch
      %10 = sbr.rel target = $region3
    $region8: #{tpu_custom_call.1} parent=1 // loop_exit
      _

</llo_original>
